<compile_context>
chip_gen: v7x
topology: tpu7x:2x2x1
jax: 0.10.0
libtpu: 0.0.40
codegen_flags: <defaults>
</compile_context>

<pallas_src>
import jax
import jax.numpy as jnp
from jax.experimental import pallas as pl
from jax.experimental.pallas import tpu as pltpu

LANE = 128


def _mlp7_kernel(x_ref, w1_ref, b1_ref, wh_ref, bh_ref, wf_ref, bf_ref, o_ref):
    # x_ref : (TILE_B, D_pad)        VMEM (streamed per grid step)
    # w1_ref: (D_pad, N_pad)         VMEM (resident, single-buffered)
    # b1_ref: (1, N_pad)      f32    VMEM (resident)
    # wh_ref: (5, N_pad, N_pad)      VMEM (resident, layers 2..6 stacked)
    # bh_ref: (5, 1, N_pad)   f32    VMEM (resident)
    # wf_ref: (N_pad, O_pad)         VMEM (resident)
    # bf_ref: (1, O_pad)      f32    VMEM (resident)
    # o_ref : (TILE_B, O_pad)        VMEM (streamed per grid step)
    wdt = w1_ref.dtype

    # layer1 + ReLU  (accumulate in f32 on the MXU, epilogue in f32 on the VPU)
    h = jnp.dot(x_ref[...].astype(wdt), w1_ref[...],
                preferred_element_type=jnp.float32) + b1_ref[...]
    h = jnp.maximum(h, 0.0)

    # layers 2..6 + ReLU (static unroll over the stacked hidden weights)
    for l in range(wh_ref.shape[0]):
        h = jnp.dot(h.astype(wdt), wh_ref[l],
                    preferred_element_type=jnp.float32) + bh_ref[l]
        h = jnp.maximum(h, 0.0)

    # layerfin (no activation)
    y = jnp.dot(h.astype(wdt), wf_ref[...],
                preferred_element_type=jnp.float32) + bf_ref[...]
    o_ref[...] = y.astype(o_ref.dtype)


def _round_up(v, m):
    return ((v + m - 1) // m) * m


def _pad2(a, rows, cols):
    return jnp.pad(a, ((0, rows - a.shape[0]), (0, cols - a.shape[1])))


def _choose_batch_tiling(B, d_pad, o_pad, x_itemsize, out_itemsize, tile_b=None):
    """Pick (tile_b, B_pad, num_tiles) for the batch grid.

    Goals: (a) tiles big enough to amortize the ~0.35us per-grid-step overhead,
    (b) streamed double-buffered x/out tiles within ~8 MiB of VMEM, (c) >= 2
    grid steps for nontrivial batches so v7x megacore can split the work, and
    (d) no near-2x batch padding for unlucky B (tail handled by shrinking the
    tile, not doubling B_pad).
    """
    B8 = _round_up(max(B, 8), 8)
    if tile_b is not None:
        tile_b = max(8, _round_up(min(tile_b, B8), 8))
        n_tiles = pl.cdiv(B8, tile_b)
        return tile_b, tile_b * n_tiles, n_tiles

    per_row = (d_pad * x_itemsize + o_pad * out_itemsize) * 2  # 2 pipeline bufs
    budget = 8 << 20                                            # streamed-tile budget
    max_tile = max(256, min(4096, (budget // per_row) // 8 * 8))

    n_tiles = pl.cdiv(B8, max_tile)
    # v7x: ensure the "parallel" batch axis has >= 2 steps once the batch is
    # big enough that splitting is not pure step overhead (harmless on 1-TC chips).
    if n_tiles == 1 and B8 >= 512:
        n_tiles = 2
    tile_b = _round_up(pl.cdiv(B8, n_tiles), 8)
    return tile_b, tile_b * n_tiles, n_tiles


def neural_network_forward(x, weights, biases, *, tile_b=None,
                           param_dtype=jnp.bfloat16, out_dtype=None):
    """Fused forward of the 7-layer MLP.

    x       : (B, D_in)
    weights : list of 7 arrays [W1 (D_in,N), W2..W6 (N,N), Wfin (N,O)]
              (each == corresponding layer.weight.T)
    biases  : list of 7 arrays [b1..b6 (N,), bfin (O,)]
    returns : (B, O) in out_dtype (defaults to x.dtype)
    """
    assert len(weights) == 7 and len(biases) == 7
    B, D_in = x.shape
    N = weights[0].shape[1]
    O = weights[-1].shape[1]
    if out_dtype is None:
        out_dtype = x.dtype

    # ---- lane-dense padding of feature dims (zeros are mathematically inert) ----
    D_pad = _round_up(D_in, LANE)
    N_pad = _round_up(N, LANE)
    O_pad = _round_up(O, LANE)

    w1 = _pad2(weights[0], D_pad, N_pad).astype(param_dtype)
    b1 = _pad2(biases[0].reshape(1, -1), 1, N_pad).astype(jnp.float32)
    wh = jnp.stack([_pad2(w, N_pad, N_pad) for w in weights[1:6]]).astype(param_dtype)
    bh = jnp.stack([_pad2(b.reshape(1, -1), 1, N_pad) for b in biases[1:6]]
                   ).astype(jnp.float32)
    wf = _pad2(weights[6], N_pad, O_pad).astype(param_dtype)
    bf = _pad2(biases[6].reshape(1, -1), 1, O_pad).astype(jnp.float32)

    # ---- batch tiling ----
    x_itemsize = jnp.dtype(x.dtype).itemsize
    out_itemsize = jnp.dtype(out_dtype).itemsize
    tile_b, B_pad, n_tiles = _choose_batch_tiling(
        B, D_pad, O_pad, x_itemsize, out_itemsize, tile_b)
    xp = jnp.pad(x, ((0, B_pad - B), (0, D_pad - D_in)))

    grid = (n_tiles,)

    # ---- VMEM footprint -> explicit scoped-VMEM limit (with headroom) ----
    p_item = jnp.dtype(param_dtype).itemsize
    resident_bytes = ((D_pad * N_pad + 5 * N_pad * N_pad + N_pad * O_pad) * p_item
                      + (6 * N_pad + O_pad) * 4)                 # single-buffered
    streamed_bytes = 2 * tile_b * (D_pad * x_itemsize + O_pad * out_itemsize)
    act_bytes = 4 * tile_b * max(N_pad, O_pad) * 4               # activation headroom
    needed = resident_bytes + streamed_bytes + act_bytes
    vmem_limit = int(min(64 << 20, max(needed + (4 << 20), 24 << 20)))

    resident = dict(pipeline_mode=pl.Buffered(1))  # constant index map -> 1 buffer

    out = pl.pallas_call(
        _mlp7_kernel,
        out_shape=jax.ShapeDtypeStruct((B_pad, O_pad), out_dtype),
        grid=grid,
        in_specs=[
            pl.BlockSpec((tile_b, D_pad), lambda i: (i, 0)),                  # x: streamed
            pl.BlockSpec((D_pad, N_pad), lambda i: (0, 0), **resident),       # W1
            pl.BlockSpec((1, N_pad), lambda i: (0, 0), **resident),           # b1
            pl.BlockSpec((5, N_pad, N_pad), lambda i: (0, 0, 0), **resident), # W2..W6
            pl.BlockSpec((5, 1, N_pad), lambda i: (0, 0, 0), **resident),     # b2..b6
            pl.BlockSpec((N_pad, O_pad), lambda i: (0, 0), **resident),       # Wfin
            pl.BlockSpec((1, O_pad), lambda i: (0, 0), **resident),           # bfin
        ],
        out_specs=pl.BlockSpec((tile_b, O_pad), lambda i: (i, 0)),
        compiler_params=pltpu.CompilerParams(
            dimension_semantics=("parallel",),   # v7x: split batch grid over 2 TCs
            vmem_limit_bytes=vmem_limit,
        ),
    )(xp, w1, b1, wh, bh, wf, bf)

    return out[:B, :O]


def init_params(key, input_size, output_size, nnode):
    """Deterministic init mimicking nn.Linear default (uniform +/- 1/sqrt(fan_in))."""
    sizes = [(input_size, nnode)] + [(nnode, nnode)] * 5 + [(nnode, output_size)]
    keys = jax.random.split(key, 2 * len(sizes))
    weights, biases = [], []
    for idx, (fan_in, fan_out) in enumerate(sizes):
        bound = 1.0 / (fan_in ** 0.5)
        w = jax.random.uniform(keys[2 * idx], (fan_in, fan_out), jnp.float32,
                               -bound, bound)
        b = jax.random.uniform(keys[2 * idx + 1], (fan_out,), jnp.float32,
                               -bound, bound)
        weights.append(w)
        biases.append(b)
    return weights, biases


def reference_forward(x, weights, biases):
    h = x
    for w, b in zip(weights[:6], biases[:6]):
        h = jnp.maximum(h @ w + b, 0.0)
    return h @ weights[6] + biases[6]


if __name__ == "__main__":
    input_size = 16
    output_size = 10
    nnode = 32
    batch = 8

    key = jax.random.PRNGKey(0)
    kx, kp = jax.random.split(key)
    x = jax.random.normal(kx, (batch, input_size), jnp.float32)
    weights, biases = init_params(kp, input_size, output_size, nnode)

    ref = reference_forward(x, weights, biases)

    # f32-weight path (strict correctness check)
    out_f32 = neural_network_forward(x, weights, biases, param_dtype=jnp.float32)
    out_f32 = jax.block_until_ready(out_f32)
    assert out_f32.shape == (batch, output_size)
    assert jnp.allclose(out_f32, ref, atol=1e-5, rtol=1e-5)

    # default path (bf16 weights, f32 MXU accumulation; loose check)
    out_bf16 = neural_network_forward(x, weights, biases)
    out_bf16 = jax.block_until_ready(out_bf16)
    assert out_bf16.shape == (batch, output_size)
    assert bool(jnp.all(jnp.isfinite(out_bf16)))
    assert jnp.allclose(out_bf16, ref, atol=1e-1, rtol=1e-1)

    # larger, non-tile-aligned batch exercises the multi-step grid
    # (>=2 steps -> v7x megacore split) and the tail-friendly padding logic.
    xb = jax.random.normal(kx, (1040, input_size), jnp.float32)
    refb = reference_forward(xb, weights, biases)
    outb = jax.block_until_ready(
        neural_network_forward(xb, weights, biases, param_dtype=jnp.float32))
    assert outb.shape == (1040, output_size)
    assert jnp.allclose(outb, refb, atol=1e-5, rtol=1e-5)

    print("KERNEL_OK")
</pallas_src>

<mosaic_0001>
module attributes {stable_mosaic.version = 11 : i64} {
  func.func @_mlp7_kernel(%arg0: i32, %arg1: memref<8x128xf32, #tpu.memory_space<vmem>>, %arg2: memref<128x128xf32, #tpu.memory_space<vmem>>, %arg3: memref<1x128xf32, #tpu.memory_space<vmem>>, %arg4: memref<5x128x128xf32, #tpu.memory_space<vmem>>, %arg5: memref<5x1x128xf32, #tpu.memory_space<vmem>>, %arg6: memref<128x128xf32, #tpu.memory_space<vmem>>, %arg7: memref<1x128xf32, #tpu.memory_space<vmem>>, %arg8: memref<8x128xf32, #tpu.memory_space<vmem>>) attributes {dimension_semantics = [#tpu.dimension_semantics<parallel>], iteration_bounds = array<i64: 1>, scalar_prefetch = 0 : i64, scratch_operands = 0 : i64, tpu.core_type = #tpu.core_type<tc>, window_params = [{transform_indices = @transform_0, window_bounds = array<i64: 8, 128>}, {pipeline_mode = #tpu.pipeline_mode<synchronous>, transform_indices = @transform_1, window_bounds = array<i64: 128, 128>}, {pipeline_mode = #tpu.pipeline_mode<synchronous>, transform_indices = @transform_2, window_bounds = array<i64: 1, 128>}, {pipeline_mode = #tpu.pipeline_mode<synchronous>, transform_indices = @transform_3, window_bounds = array<i64: 5, 128, 128>}, {pipeline_mode = #tpu.pipeline_mode<synchronous>, transform_indices = @transform_4, window_bounds = array<i64: 5, 1, 128>}, {pipeline_mode = #tpu.pipeline_mode<synchronous>, transform_indices = @transform_5, window_bounds = array<i64: 128, 128>}, {pipeline_mode = #tpu.pipeline_mode<synchronous>, transform_indices = @transform_6, window_bounds = array<i64: 1, 128>}, {transform_indices = @transform_7, window_bounds = array<i64: 8, 128>}]} {
    %c0 = arith.constant 0 : index
    %c0_0 = arith.constant 0 : index
    %0 = vector.load %arg1[%c0, %c0_0] : memref<8x128xf32, #tpu.memory_space<vmem>>, vector<8x128xf32>
    %c0_1 = arith.constant 0 : index
    %c0_2 = arith.constant 0 : index
    %1 = vector.load %arg2[%c0_1, %c0_2] : memref<128x128xf32, #tpu.memory_space<vmem>>, vector<128x128xf32>
    %cst = arith.constant dense<0.000000e+00> : vector<8x128xf32>
    %2 = tpu.matmul %0, %1, %cst {dimension_numbers = #tpu.dot_dimension_numbers<[1], [0], [0], [1], [0, 0, 1, 1], [], []>} : vector<8x128xf32>, vector<128x128xf32>, vector<8x128xf32> -> vector<8x128xf32>
    %c0_3 = arith.constant 0 : index
    %c0_4 = arith.constant 0 : index
    %3 = vector.load %arg3[%c0_3, %c0_4] : memref<1x128xf32, #tpu.memory_space<vmem>>, vector<1x128xf32>
    %4 = vector.broadcast %3 : vector<1x128xf32> to vector<8x128xf32>
    %5 = arith.addf %2, %4 : vector<8x128xf32>
    %cst_5 = arith.constant 0.000000e+00 : f32
    %6 = vector.broadcast %cst_5 : f32 to vector<8x128xf32>
    %7 = arith.maximumf %5, %6 : vector<8x128xf32>
    %c0_6 = arith.constant 0 : index
    %c0_7 = arith.constant 0 : index
    %c0_8 = arith.constant 0 : index
    %8 = vector.load %arg4[%c0_6, %c0_7, %c0_8] : memref<5x128x128xf32, #tpu.memory_space<vmem>>, vector<1x128x128xf32>
    %9 = vector.shape_cast %8 : vector<1x128x128xf32> to vector<128x128xf32>
    %cst_9 = arith.constant dense<0.000000e+00> : vector<8x128xf32>
    %10 = tpu.matmul %7, %9, %cst_9 {dimension_numbers = #tpu.dot_dimension_numbers<[1], [0], [0], [1], [0, 0, 1, 1], [], []>} : vector<8x128xf32>, vector<128x128xf32>, vector<8x128xf32> -> vector<8x128xf32>
    %c0_10 = arith.constant 0 : index
    %c0_11 = arith.constant 0 : index
    %c0_12 = arith.constant 0 : index
    %11 = vector.load %arg5[%c0_10, %c0_11, %c0_12] : memref<5x1x128xf32, #tpu.memory_space<vmem>>, vector<1x1x128xf32>
    %12 = vector.shape_cast %11 : vector<1x1x128xf32> to vector<1x128xf32>
    %13 = vector.broadcast %12 : vector<1x128xf32> to vector<8x128xf32>
    %14 = arith.addf %10, %13 : vector<8x128xf32>
    %cst_13 = arith.constant 0.000000e+00 : f32
    %15 = vector.broadcast %cst_13 : f32 to vector<8x128xf32>
    %16 = arith.maximumf %14, %15 : vector<8x128xf32>
    %c1 = arith.constant 1 : index
    %c0_14 = arith.constant 0 : index
    %c0_15 = arith.constant 0 : index
    %17 = vector.load %arg4[%c1, %c0_14, %c0_15] : memref<5x128x128xf32, #tpu.memory_space<vmem>>, vector<1x128x128xf32>
    %18 = vector.shape_cast %17 : vector<1x128x128xf32> to vector<128x128xf32>
    %cst_16 = arith.constant dense<0.000000e+00> : vector<8x128xf32>
    %19 = tpu.matmul %16, %18, %cst_16 {dimension_numbers = #tpu.dot_dimension_numbers<[1], [0], [0], [1], [0, 0, 1, 1], [], []>} : vector<8x128xf32>, vector<128x128xf32>, vector<8x128xf32> -> vector<8x128xf32>
    %c1_17 = arith.constant 1 : index
    %c0_18 = arith.constant 0 : index
    %c0_19 = arith.constant 0 : index
    %20 = vector.load %arg5[%c1_17, %c0_18, %c0_19] : memref<5x1x128xf32, #tpu.memory_space<vmem>>, vector<1x1x128xf32>
    %21 = vector.shape_cast %20 : vector<1x1x128xf32> to vector<1x128xf32>
    %22 = vector.broadcast %21 : vector<1x128xf32> to vector<8x128xf32>
    %23 = arith.addf %19, %22 : vector<8x128xf32>
    %cst_20 = arith.constant 0.000000e+00 : f32
    %24 = vector.broadcast %cst_20 : f32 to vector<8x128xf32>
    %25 = arith.maximumf %23, %24 : vector<8x128xf32>
    %c2 = arith.constant 2 : index
    %c0_21 = arith.constant 0 : index
    %c0_22 = arith.constant 0 : index
    %26 = vector.load %arg4[%c2, %c0_21, %c0_22] : memref<5x128x128xf32, #tpu.memory_space<vmem>>, vector<1x128x128xf32>
    %27 = vector.shape_cast %26 : vector<1x128x128xf32> to vector<128x128xf32>
    %cst_23 = arith.constant dense<0.000000e+00> : vector<8x128xf32>
    %28 = tpu.matmul %25, %27, %cst_23 {dimension_numbers = #tpu.dot_dimension_numbers<[1], [0], [0], [1], [0, 0, 1, 1], [], []>} : vector<8x128xf32>, vector<128x128xf32>, vector<8x128xf32> -> vector<8x128xf32>
    %c2_24 = arith.constant 2 : index
    %c0_25 = arith.constant 0 : index
    %c0_26 = arith.constant 0 : index
    %29 = vector.load %arg5[%c2_24, %c0_25, %c0_26] : memref<5x1x128xf32, #tpu.memory_space<vmem>>, vector<1x1x128xf32>
    %30 = vector.shape_cast %29 : vector<1x1x128xf32> to vector<1x128xf32>
    %31 = vector.broadcast %30 : vector<1x128xf32> to vector<8x128xf32>
    %32 = arith.addf %28, %31 : vector<8x128xf32>
    %cst_27 = arith.constant 0.000000e+00 : f32
    %33 = vector.broadcast %cst_27 : f32 to vector<8x128xf32>
    %34 = arith.maximumf %32, %33 : vector<8x128xf32>
    %c3 = arith.constant 3 : index
    %c0_28 = arith.constant 0 : index
    %c0_29 = arith.constant 0 : index
    %35 = vector.load %arg4[%c3, %c0_28, %c0_29] : memref<5x128x128xf32, #tpu.memory_space<vmem>>, vector<1x128x128xf32>
    %36 = vector.shape_cast %35 : vector<1x128x128xf32> to vector<128x128xf32>
    %cst_30 = arith.constant dense<0.000000e+00> : vector<8x128xf32>
    %37 = tpu.matmul %34, %36, %cst_30 {dimension_numbers = #tpu.dot_dimension_numbers<[1], [0], [0], [1], [0, 0, 1, 1], [], []>} : vector<8x128xf32>, vector<128x128xf32>, vector<8x128xf32> -> vector<8x128xf32>
    %c3_31 = arith.constant 3 : index
    %c0_32 = arith.constant 0 : index
    %c0_33 = arith.constant 0 : index
    %38 = vector.load %arg5[%c3_31, %c0_32, %c0_33] : memref<5x1x128xf32, #tpu.memory_space<vmem>>, vector<1x1x128xf32>
    %39 = vector.shape_cast %38 : vector<1x1x128xf32> to vector<1x128xf32>
    %40 = vector.broadcast %39 : vector<1x128xf32> to vector<8x128xf32>
    %41 = arith.addf %37, %40 : vector<8x128xf32>
    %cst_34 = arith.constant 0.000000e+00 : f32
    %42 = vector.broadcast %cst_34 : f32 to vector<8x128xf32>
    %43 = arith.maximumf %41, %42 : vector<8x128xf32>
    %c4 = arith.constant 4 : index
    %c0_35 = arith.constant 0 : index
    %c0_36 = arith.constant 0 : index
    %44 = vector.load %arg4[%c4, %c0_35, %c0_36] : memref<5x128x128xf32, #tpu.memory_space<vmem>>, vector<1x128x128xf32>
    %45 = vector.shape_cast %44 : vector<1x128x128xf32> to vector<128x128xf32>
    %cst_37 = arith.constant dense<0.000000e+00> : vector<8x128xf32>
    %46 = tpu.matmul %43, %45, %cst_37 {dimension_numbers = #tpu.dot_dimension_numbers<[1], [0], [0], [1], [0, 0, 1, 1], [], []>} : vector<8x128xf32>, vector<128x128xf32>, vector<8x128xf32> -> vector<8x128xf32>
    %c4_38 = arith.constant 4 : index
    %c0_39 = arith.constant 0 : index
    %c0_40 = arith.constant 0 : index
    %47 = vector.load %arg5[%c4_38, %c0_39, %c0_40] : memref<5x1x128xf32, #tpu.memory_space<vmem>>, vector<1x1x128xf32>
    %48 = vector.shape_cast %47 : vector<1x1x128xf32> to vector<1x128xf32>
    %49 = vector.broadcast %48 : vector<1x128xf32> to vector<8x128xf32>
    %50 = arith.addf %46, %49 : vector<8x128xf32>
    %cst_41 = arith.constant 0.000000e+00 : f32
    %51 = vector.broadcast %cst_41 : f32 to vector<8x128xf32>
    %52 = arith.maximumf %50, %51 : vector<8x128xf32>
    %c0_42 = arith.constant 0 : index
    %c0_43 = arith.constant 0 : index
    %53 = vector.load %arg6[%c0_42, %c0_43] : memref<128x128xf32, #tpu.memory_space<vmem>>, vector<128x128xf32>
    %cst_44 = arith.constant dense<0.000000e+00> : vector<8x128xf32>
    %54 = tpu.matmul %52, %53, %cst_44 {dimension_numbers = #tpu.dot_dimension_numbers<[1], [0], [0], [1], [0, 0, 1, 1], [], []>} : vector<8x128xf32>, vector<128x128xf32>, vector<8x128xf32> -> vector<8x128xf32>
    %c0_45 = arith.constant 0 : index
    %c0_46 = arith.constant 0 : index
    %55 = vector.load %arg7[%c0_45, %c0_46] : memref<1x128xf32, #tpu.memory_space<vmem>>, vector<1x128xf32>
    %56 = vector.broadcast %55 : vector<1x128xf32> to vector<8x128xf32>
    %57 = arith.addf %54, %56 : vector<8x128xf32>
    %c0_47 = arith.constant 0 : index
    %c0_48 = arith.constant 0 : index
    %58 = vector.load %arg8[%c0_47, %c0_48] : memref<8x128xf32, #tpu.memory_space<vmem>>, vector<8x128xf32>
    tpu.vector_store %arg8[%c0_47, %c0_48], %57 {strides = array<i32>} : memref<8x128xf32, #tpu.memory_space<vmem>>, vector<8x128xf32>,
    return
  }
  func.func @transform_0(%arg0: i32) -> (i32, i32) {
    %c0_i32 = arith.constant 0 : i32
    %c0_i32_0 = arith.constant 0 : i32
    return %arg0, %c0_i32 : i32, i32
  }
  func.func @transform_1(%arg0: i32) -> (i32, i32) {
    %c0_i32 = arith.constant 0 : i32
    %c0_i32_0 = arith.constant 0 : i32
    %c0_i32_1 = arith.constant 0 : i32
    return %c0_i32, %c0_i32_0 : i32, i32
  }
  func.func @transform_2(%arg0: i32) -> (i32, i32) {
    %c0_i32 = arith.constant 0 : i32
    %c0_i32_0 = arith.constant 0 : i32
    %c0_i32_1 = arith.constant 0 : i32
    return %c0_i32, %c0_i32_0 : i32, i32
  }
  func.func @transform_3(%arg0: i32) -> (i32, i32, i32) {
    %c0_i32 = arith.constant 0 : i32
    %c0_i32_0 = arith.constant 0 : i32
    %c0_i32_1 = arith.constant 0 : i32
    %c0_i32_2 = arith.constant 0 : i32
    return %c0_i32, %c0_i32_0, %c0_i32_1 : i32, i32, i32
  }
  func.func @transform_4(%arg0: i32) -> (i32, i32, i32) {
    %c0_i32 = arith.constant 0 : i32
    %c0_i32_0 = arith.constant 0 : i32
    %c0_i32_1 = arith.constant 0 : i32
    %c0_i32_2 = arith.constant 0 : i32
    return %c0_i32, %c0_i32_0, %c0_i32_1 : i32, i32, i32
  }
  func.func @transform_5(%arg0: i32) -> (i32, i32) {
    %c0_i32 = arith.constant 0 : i32
    %c0_i32_0 = arith.constant 0 : i32
    %c0_i32_1 = arith.constant 0 : i32
    return %c0_i32, %c0_i32_0 : i32, i32
  }
  func.func @transform_6(%arg0: i32) -> (i32, i32) {
    %c0_i32 = arith.constant 0 : i32
    %c0_i32_0 = arith.constant 0 : i32
    %c0_i32_1 = arith.constant 0 : i32
    return %c0_i32, %c0_i32_0 : i32, i32
  }
  func.func @transform_7(%arg0: i32) -> (i32, i32) {
    %c0_i32 = arith.constant 0 : i32
    %c0_i32_0 = arith.constant 0 : i32
    return %arg0, %c0_i32 : i32, i32
  }
}

</mosaic_0001>

<llo_original>
// kernel: tpu_custom_call.1
$region0: #{tpu_custom_call.1}
  #allocation0 [shape = 'u32[]', space=smem, size = 0x4, offset = 0x4, fixed_abs, tag = 'smem constant byte address 0x4 - core index']
  #allocation1 [shape = 'u32[144,128]{1,0:T(1,128)}', space=vmem, size = 0x12000, scoped, tag = 'internal scratch']
  %s0 = inlined_call_operand.hbm [shape: f32[8,128], index: 0, kind: input, shape index: {}]
  %s1 = inlined_call_operand.hbm [shape: f32[128,128], index: 1, kind: input, shape index: {}]
  %s2 = inlined_call_operand.vmem [shape: f32[1,128], index: 2, kind: input, shape index: {}]
  %s3 = inlined_call_operand.hbm [shape: f32[5,128,128], index: 3, kind: input, shape index: {}]
  %s4 = inlined_call_operand.vmem [shape: f32[5,1,128], index: 4, kind: input, shape index: {}]
  %s5 = inlined_call_operand.hbm [shape: f32[128,128], index: 5, kind: input, shape index: {}]
  %s6 = inlined_call_operand.vmem [shape: f32[1,128], index: 6, kind: input, shape index: {}]
  %s7 = inlined_call_operand.hbm [shape: f32[8,128], index: 7, kind: output, shape index: {}]
  %s8 = sld [smem:[#allocation0]]
  $region54: #{tpu_custom_call.1} parent=0
    _
  %s10 = ssub.s32 1, %s8
  %s11 = scalar_select 0, %s10, %s8
  $region1: #{tpu_custom_call.1} parent=0
    #allocation2 [shape = 'u8[4096]{0}', space=vmem, size = 0x1000, scoped, tag = 'input window, operand 0, single buffered']
    #allocation3 [shape = 's32[1]{0}', space=sflag, size = 0x4, scoped, tag = 'scoped memory for tpu_custom_call.1']
    #allocation4 [shape = 's32[1]{0}', space=sflag, size = 0x4, scoped, tag = 'scoped memory for tpu_custom_call.1']
    #allocation5 [shape = 'u8[65536]{0}', space=vmem, size = 0x10000, scoped, tag = 'input window, operand 1, single buffered']
    #allocation6 [shape = 's32[1]{0}', space=sflag, size = 0x4, scoped, tag = 'scoped memory for tpu_custom_call.1']
    #allocation7 [shape = 'u8[327680]{0}', space=vmem, size = 0x50000, scoped, tag = 'input window, operand 3, single buffered']
    #allocation8 [shape = 'u8[65536]{0}', space=vmem, size = 0x10000, scoped, tag = 'input window, operand 5, single buffered']
    #allocation9 [shape = 's32[1]{0}', space=sflag, size = 0x4, scoped, tag = 'scoped memory for tpu_custom_call.1']
    #allocation10 [shape = 'u8[4096]{0}', space=vmem, size = 0x1000, scoped, tag = 'output window, operand 0, single buffered']
    %12 = vsyncpa [#allocation3], 0
    %13 = vsyncpa [#allocation6], 0
    %14 = vsyncpa [#allocation9], 0
    %15 = vsyncpa [#allocation4], 0
    // Predicated region
    $region2: #{tpu_custom_call.1} parent=1 // pred_check
      _
    $region3: #{tpu_custom_call.1} parent=1 // pred_check_branch
      %17 = sbr.rel (0) target = $region5
    $region4: #{tpu_custom_call.1} parent=1 // pred_region
      %s19 = ssub.s32 128, 128
      %20 = vsyncadd [#allocation3], %s19
      %s22 = sshll.u32 [#allocation2], 4
      %s23 = int_to_ptr.vmem [resolvable:$true] %s22
      %25 = dma.hbm_to_vmem [thread:$0]  %s0, 128, %s23, [#allocation3]
    $region5: #{tpu_custom_call.1} parent=1 // pred_fallthru
      _
    // Predicated region
    $region6: #{tpu_custom_call.1} parent=1 // pred_check
      _
    $region7: #{tpu_custom_call.1} parent=1 // pred_check_branch
      %27 = sbr.rel (0) target = $region9
    $region8: #{tpu_custom_call.1} parent=1 // pred_region
      %s29 = ssub.s32 2048, 2048
      %30 = vsyncadd [#allocation6], %s29
      %s31 = sshll.u32 [#allocation5], 4
      %s32 = int_to_ptr.vmem [resolvable:$true] %s31
      %37 = dma.hbm_to_vmem [thread:$0]  %s1, 2048, %s32, [#allocation6], 128, 128, 8
    $region9: #{tpu_custom_call.1} parent=1 // pred_fallthru
      _
    // Predicated region
    $region10: #{tpu_custom_call.1} parent=1 // pred_check
      _
    $region11: #{tpu_custom_call.1} parent=1 // pred_check_branch
      %39 = sbr.rel (0) target = $region13
    $region12: #{tpu_custom_call.1} parent=1 // pred_region
      _
    $region13: #{tpu_custom_call.1} parent=1 // pred_fallthru
      _
    // Predicated region
    $region14: #{tpu_custom_call.1} parent=1 // pred_check
      _
    $region15: #{tpu_custom_call.1} parent=1 // pred_check_branch
      %41 = sbr.rel (0) target = $region17
    $region16: #{tpu_custom_call.1} parent=1 // pred_region
      %s43 = ssub.s32 10240, 10240
      %44 = vsyncadd [#allocation6], %s43
      %s45 = sshll.u32 [#allocation7], 4
      %s46 = int_to_ptr.vmem [resolvable:$true] %s45
      %51 = dma.hbm_to_vmem [thread:$0]  %s3, 10240, %s46, [#allocation6], 128, 128, 8
    $region17: #{tpu_custom_call.1} parent=1 // pred_fallthru
      _
    // Predicated region
    $region18: #{tpu_custom_call.1} parent=1 // pred_check
      _
    $region19: #{tpu_custom_call.1} parent=1 // pred_check_branch
      %53 = sbr.rel (0) target = $region21
    $region20: #{tpu_custom_call.1} parent=1 // pred_region
      _
    $region21: #{tpu_custom_call.1} parent=1 // pred_fallthru
      _
    // Predicated region
    $region22: #{tpu_custom_call.1} parent=1 // pred_check
      _
    $region23: #{tpu_custom_call.1} parent=1 // pred_check_branch
      %55 = sbr.rel (0) target = $region25
    $region24: #{tpu_custom_call.1} parent=1 // pred_region
      %s57 = ssub.s32 2048, 2048
      %58 = vsyncadd [#allocation9], %s57
      %s59 = sshll.u32 [#allocation8], 4
      %s60 = int_to_ptr.vmem [resolvable:$true] %s59
      %65 = dma.hbm_to_vmem [thread:$0]  %s5, 2048, %s60, [#allocation9], 128, 128, 8
    $region25: #{tpu_custom_call.1} parent=1 // pred_fallthru
      _
    // Predicated region
    $region26: #{tpu_custom_call.1} parent=1 // pred_check
      _
    $region27: #{tpu_custom_call.1} parent=1 // pred_check_branch
      %67 = sbr.rel (0) target = $region29
    $region28: #{tpu_custom_call.1} parent=1 // pred_region
      _
    $region29: #{tpu_custom_call.1} parent=1 // pred_fallthru
      _
    // Predicated region
    $region30: #{tpu_custom_call.1} parent=1 // pred_check
      _
    $region31: #{tpu_custom_call.1} parent=1 // pred_check_branch
      %69 = sbr.rel (0) target = $region33
    $region32: #{tpu_custom_call.1} parent=1 // pred_region
      %70 = dma.done [#allocation3], 128
    $region33: #{tpu_custom_call.1} parent=1 // pred_fallthru
      _
    // Predicated region
    $region34: #{tpu_custom_call.1} parent=1 // pred_check
      _
    $region35: #{tpu_custom_call.1} parent=1 // pred_check_branch
      %72 = sbr.rel (0) target = $region37
    $region36: #{tpu_custom_call.1} parent=1 // pred_region
      %73 = dma.done [#allocation6], 2048
    $region37: #{tpu_custom_call.1} parent=1 // pred_fallthru
      _
    // Predicated region
    $region38: #{tpu_custom_call.1} parent=1 // pred_check
      _
    $region39: #{tpu_custom_call.1} parent=1 // pred_check_branch
      %75 = sbr.rel (0) target = $region41
    $region40: #{tpu_custom_call.1} parent=1 // pred_region
      %76 = dma.done [#allocation6], 10240
    $region41: #{tpu_custom_call.1} parent=1 // pred_fallthru
      _
    // Predicated region
    $region42: #{tpu_custom_call.1} parent=1 // pred_check
      _
    $region43: #{tpu_custom_call.1} parent=1 // pred_check_branch
      %78 = sbr.rel (0) target = $region45
    $region44: #{tpu_custom_call.1} parent=1 // pred_region
      %79 = dma.done [#allocation9], 2048
    $region45: #{tpu_custom_call.1} parent=1 // pred_fallthru
      _
    %v80 = vld [vmem:[#allocation2] sm:$0xff]
    %v81 = vld [vmem:[#allocation5] sm:$0xff]
    %v82 = vld [vmem:[#allocation5 + $0x8] sm:$0xff]
    %v83 = vld [vmem:[#allocation5 + $0x10] sm:$0xff]
    %v84 = vld [vmem:[#allocation5 + $0x18] sm:$0xff]
    %v85 = vld [vmem:[#allocation5 + $0x20] sm:$0xff]
    %v86 = vld [vmem:[#allocation5 + $0x28] sm:$0xff]
    %v87 = vld [vmem:[#allocation5 + $0x30] sm:$0xff]
    %v88 = vld [vmem:[#allocation5 + $0x38] sm:$0xff]
    %v89 = vld [vmem:[#allocation5 + $0x40] sm:$0xff]
    %v90 = vld [vmem:[#allocation5 + $0x48] sm:$0xff]
    %v91 = vld [vmem:[#allocation5 + $0x50] sm:$0xff]
    %v92 = vld [vmem:[#allocation5 + $0x58] sm:$0xff]
    %v93 = vld [vmem:[#allocation5 + $0x60] sm:$0xff]
    %v94 = vld [vmem:[#allocation5 + $0x68] sm:$0xff]
    %v95 = vld [vmem:[#allocation5 + $0x70] sm:$0xff]
    %v96 = vld [vmem:[#allocation5 + $0x78] sm:$0xff]
    %v97 = vld [vmem:[%s2] sm:$0x1]
    %v99 = vlaneseq
    %v100 = vshrl.u32 %v99, 7
    %v101 = vsub.s32 0, %v100
    %v102 = vrot.slane %v97, %v101
    %104 = vmatprep.subr.mxu0 0.0
    %105 = vmatpush1.msra.mxu0 %v81
    %106 = vmatprep.subr.mxu0 0.0
    %107 = vmatpush1.msra.mxu0 %v82
    %108 = vmatprep.subr.mxu0 0.0
    %109 = vmatpush1.msra.mxu0 %v83
    %110 = vmatprep.subr.mxu0 0.0
    %111 = vmatpush1.msra.mxu0 %v84
    %112 = vmatprep.subr.mxu0 0.0
    %113 = vmatpush1.msra.mxu0 %v85
    %114 = vmatprep.subr.mxu0 0.0
    %115 = vmatpush1.msra.mxu0 %v86
    %116 = vmatprep.subr.mxu0 0.0
    %117 = vmatpush1.msra.mxu0 %v87
    %118 = vmatprep.subr.mxu0 0.0
    %119 = vmatpush1.msra.mxu0 %v88
    %120 = vmatprep.subr.mxu0 0.0
    %121 = vmatpush1.msra.mxu0 %v89
    %122 = vmatprep.subr.mxu0 0.0
    %123 = vmatpush1.msra.mxu0 %v90
    %124 = vmatprep.subr.mxu0 0.0
    %125 = vmatpush1.msra.mxu0 %v91
    %126 = vmatprep.subr.mxu0 0.0
    %127 = vmatpush1.msra.mxu0 %v92
    %128 = vmatprep.subr.mxu0 0.0
    %129 = vmatpush1.msra.mxu0 %v93
    %130 = vmatprep.subr.mxu0 0.0
    %131 = vmatpush1.msra.mxu0 %v94
    %132 = vmatprep.subr.mxu0 0.0
    %133 = vmatpush1.msra.mxu0 %v95
    %134 = vmatprep.subr.mxu0 0.0
    %135 = vmatpush1.msra.mxu0 %v96
    %136 = vmatprep.subr.mxu0 0.0
    %137 = vmatpush1.msra.mxu0 0.0
    %138 = vmatprep.subr.mxu0 0.0
    %139 = vmatpush1.msra.mxu0 0.0
    %140 = vmatprep.subr.mxu0 0.0
    %141 = vmatpush1.msra.mxu0 0.0
    %142 = vmatprep.subr.mxu0 0.0
    %143 = vmatpush1.msra.mxu0 0.0
    %144 = vmatprep.subr.mxu0 0.0
    %145 = vmatpush1.msra.mxu0 0.0
    %146 = vmatprep.subr.mxu0 0.0
    %147 = vmatpush1.msra.mxu0 0.0
    %148 = vmatprep.subr.mxu0 0.0
    %149 = vmatpush1.msra.mxu0 0.0
    %150 = vmatprep.subr.mxu0 0.0
    %151 = vmatpush1.msra.mxu0 0.0
    %152 = vmatprep.subr.mxu0 0.0
    %153 = vmatpush1.msra.mxu0 0.0
    %154 = vmatprep.subr.mxu0 0.0
    %155 = vmatpush1.msra.mxu0 0.0
    %156 = vmatprep.subr.mxu0 0.0
    %157 = vmatpush1.msra.mxu0 0.0
    %158 = vmatprep.subr.mxu0 0.0
    %159 = vmatpush1.msra.mxu0 0.0
    %160 = vmatprep.subr.mxu0 0.0
    %161 = vmatpush1.msra.mxu0 0.0
    %162 = vmatprep.subr.mxu0 0.0
    %163 = vmatpush1.msra.mxu0 0.0
    %164 = vmatprep.subr.mxu0 0.0
    %165 = vmatpush1.msra.mxu0 0.0
    %166 = vmatprep.subr.mxu0 0.0
    %167 = vmatpush1.msra.mxu0 0.0
    %168 = vmatprep.mubr.f32.mxu0 0.0
    %169 = vmatmul.mubr.f32.gmra.mrb[0].mxu0 %v80
    %v170 = vpop.f32.mrb[0].mxu0
    %v171 = vadd.f32 %v102, %v170
    %v172 = vpop.f32.mrb[0].mxu0
    %173 = vdwg.mxu0
    %v174 = vmax.f32 %v171, 0.0
    %v175 = vld [vmem:[#allocation7] sm:$0xff]
    %v176 = vld [vmem:[#allocation7 + $0x8] sm:$0xff]
    %v177 = vld [vmem:[#allocation7 + $0x10] sm:$0xff]
    %v178 = vld [vmem:[#allocation7 + $0x18] sm:$0xff]
    %v179 = vld [vmem:[#allocation7 + $0x20] sm:$0xff]
    %v180 = vld [vmem:[#allocation7 + $0x28] sm:$0xff]
    %v181 = vld [vmem:[#allocation7 + $0x30] sm:$0xff]
    %v182 = vld [vmem:[#allocation7 + $0x38] sm:$0xff]
    %v183 = vld [vmem:[#allocation7 + $0x40] sm:$0xff]
    %v184 = vld [vmem:[#allocation7 + $0x48] sm:$0xff]
    %v185 = vld [vmem:[#allocation7 + $0x50] sm:$0xff]
    %v186 = vld [vmem:[#allocation7 + $0x58] sm:$0xff]
    %v187 = vld [vmem:[#allocation7 + $0x60] sm:$0xff]
    %v188 = vld [vmem:[#allocation7 + $0x68] sm:$0xff]
    %v189 = vld [vmem:[#allocation7 + $0x70] sm:$0xff]
    %v190 = vld [vmem:[#allocation7 + $0x78] sm:$0xff]
    %v191 = vld [vmem:[%s4] sm:$0x1]
    %v193 = vlaneseq
    %v194 = vshrl.u32 %v193, 7
    %v195 = vsub.s32 0, %v194
    %v196 = vrot.slane %v191, %v195
    %198 = vmatprep.subr.mxu0 0.0
    %199 = vmatpush1.msra.mxu0 %v175
    %200 = vmatprep.subr.mxu0 0.0
    %201 = vmatpush1.msra.mxu0 %v176
    %202 = vmatprep.subr.mxu0 0.0
    %203 = vmatpush1.msra.mxu0 %v177
    %204 = vmatprep.subr.mxu0 0.0
    %205 = vmatpush1.msra.mxu0 %v178
    %206 = vmatprep.subr.mxu0 0.0
    %207 = vmatpush1.msra.mxu0 %v179
    %208 = vmatprep.subr.mxu0 0.0
    %209 = vmatpush1.msra.mxu0 %v180
    %210 = vmatprep.subr.mxu0 0.0
    %211 = vmatpush1.msra.mxu0 %v181
    %212 = vmatprep.subr.mxu0 0.0
    %213 = vmatpush1.msra.mxu0 %v182
    %214 = vmatprep.subr.mxu0 0.0
    %215 = vmatpush1.msra.mxu0 %v183
    %216 = vmatprep.subr.mxu0 0.0
    %217 = vmatpush1.msra.mxu0 %v184
    %218 = vmatprep.subr.mxu0 0.0
    %219 = vmatpush1.msra.mxu0 %v185
    %220 = vmatprep.subr.mxu0 0.0
    %221 = vmatpush1.msra.mxu0 %v186
    %222 = vmatprep.subr.mxu0 0.0
    %223 = vmatpush1.msra.mxu0 %v187
    %224 = vmatprep.subr.mxu0 0.0
    %225 = vmatpush1.msra.mxu0 %v188
    %226 = vmatprep.subr.mxu0 0.0
    %227 = vmatpush1.msra.mxu0 %v189
    %228 = vmatprep.subr.mxu0 0.0
    %229 = vmatpush1.msra.mxu0 %v190
    %230 = vmatprep.subr.mxu0 0.0
    %231 = vmatpush1.msra.mxu0 0.0
    %232 = vmatprep.subr.mxu0 0.0
    %233 = vmatpush1.msra.mxu0 0.0
    %234 = vmatprep.subr.mxu0 0.0
    %235 = vmatpush1.msra.mxu0 0.0
    %236 = vmatprep.subr.mxu0 0.0
    %237 = vmatpush1.msra.mxu0 0.0
    %238 = vmatprep.subr.mxu0 0.0
    %239 = vmatpush1.msra.mxu0 0.0
    %240 = vmatprep.subr.mxu0 0.0
    %241 = vmatpush1.msra.mxu0 0.0
    %242 = vmatprep.subr.mxu0 0.0
    %243 = vmatpush1.msra.mxu0 0.0
    %244 = vmatprep.subr.mxu0 0.0
    %245 = vmatpush1.msra.mxu0 0.0
    %246 = vmatprep.subr.mxu0 0.0
    %247 = vmatpush1.msra.mxu0 0.0
    %248 = vmatprep.subr.mxu0 0.0
    %249 = vmatpush1.msra.mxu0 0.0
    %250 = vmatprep.subr.mxu0 0.0
    %251 = vmatpush1.msra.mxu0 0.0
    %252 = vmatprep.subr.mxu0 0.0
    %253 = vmatpush1.msra.mxu0 0.0
    %254 = vmatprep.subr.mxu0 0.0
    %255 = vmatpush1.msra.mxu0 0.0
    %256 = vmatprep.subr.mxu0 0.0
    %257 = vmatpush1.msra.mxu0 0.0
    %258 = vmatprep.subr.mxu0 0.0
    %259 = vmatpush1.msra.mxu0 0.0
    %260 = vmatprep.subr.mxu0 0.0
    %261 = vmatpush1.msra.mxu0 0.0
    %262 = vmatprep.mubr.f32.mxu0 0.0
    %263 = vmatmul.mubr.f32.gmra.mrb[0].mxu0 %v174
    %v264 = vpop.f32.mrb[0].mxu0
    %v265 = vadd.f32 %v196, %v264
    %v266 = vpop.f32.mrb[0].mxu0
    %267 = vdwg.mxu0
    %v268 = vmax.f32 %v265, 0.0
    %s269 = scalar_lea.vmem [#allocation7], 128
    %v270 = vld [vmem:[%s269] sm:$0xff]
    %v271 = vld [vmem:[%s269 + $0x8] sm:$0xff]
    %v272 = vld [vmem:[%s269 + $0x10] sm:$0xff]
    %v273 = vld [vmem:[%s269 + $0x18] sm:$0xff]
    %v274 = vld [vmem:[%s269 + $0x20] sm:$0xff]
    %v275 = vld [vmem:[%s269 + $0x28] sm:$0xff]
    %v276 = vld [vmem:[%s269 + $0x30] sm:$0xff]
    %v277 = vld [vmem:[%s269 + $0x38] sm:$0xff]
    %v278 = vld [vmem:[%s269 + $0x40] sm:$0xff]
    %v279 = vld [vmem:[%s269 + $0x48] sm:$0xff]
    %v280 = vld [vmem:[%s269 + $0x50] sm:$0xff]
    %v281 = vld [vmem:[%s269 + $0x58] sm:$0xff]
    %v282 = vld [vmem:[%s269 + $0x60] sm:$0xff]
    %v283 = vld [vmem:[%s269 + $0x68] sm:$0xff]
    %v284 = vld [vmem:[%s269 + $0x70] sm:$0xff]
    %v285 = vld [vmem:[%s269 + $0x78] sm:$0xff]
    %s286 = scalar_lea.vmem %s4, 1
    %v287 = vld [vmem:[%s286] sm:$0x1]
    %v289 = vlaneseq
    %v290 = vshrl.u32 %v289, 7
    %v291 = vsub.s32 0, %v290
    %v292 = vrot.slane %v287, %v291
    %294 = vmatprep.subr.mxu0 0.0
    %295 = vmatpush1.msra.mxu0 %v270
    %296 = vmatprep.subr.mxu0 0.0
    %297 = vmatpush1.msra.mxu0 %v271
    %298 = vmatprep.subr.mxu0 0.0
    %299 = vmatpush1.msra.mxu0 %v272
    %300 = vmatprep.subr.mxu0 0.0
    %301 = vmatpush1.msra.mxu0 %v273
    %302 = vmatprep.subr.mxu0 0.0
    %303 = vmatpush1.msra.mxu0 %v274
    %304 = vmatprep.subr.mxu0 0.0
    %305 = vmatpush1.msra.mxu0 %v275
    %306 = vmatprep.subr.mxu0 0.0
    %307 = vmatpush1.msra.mxu0 %v276
    %308 = vmatprep.subr.mxu0 0.0
    %309 = vmatpush1.msra.mxu0 %v277
    %310 = vmatprep.subr.mxu0 0.0
    %311 = vmatpush1.msra.mxu0 %v278
    %312 = vmatprep.subr.mxu0 0.0
    %313 = vmatpush1.msra.mxu0 %v279
    %314 = vmatprep.subr.mxu0 0.0
    %315 = vmatpush1.msra.mxu0 %v280
    %316 = vmatprep.subr.mxu0 0.0
    %317 = vmatpush1.msra.mxu0 %v281
    %318 = vmatprep.subr.mxu0 0.0
    %319 = vmatpush1.msra.mxu0 %v282
    %320 = vmatprep.subr.mxu0 0.0
    %321 = vmatpush1.msra.mxu0 %v283
    %322 = vmatprep.subr.mxu0 0.0
    %323 = vmatpush1.msra.mxu0 %v284
    %324 = vmatprep.subr.mxu0 0.0
    %325 = vmatpush1.msra.mxu0 %v285
    %326 = vmatprep.subr.mxu0 0.0
    %327 = vmatpush1.msra.mxu0 0.0
    %328 = vmatprep.subr.mxu0 0.0
    %329 = vmatpush1.msra.mxu0 0.0
    %330 = vmatprep.subr.mxu0 0.0
    %331 = vmatpush1.msra.mxu0 0.0
    %332 = vmatprep.subr.mxu0 0.0
    %333 = vmatpush1.msra.mxu0 0.0
    %334 = vmatprep.subr.mxu0 0.0
    %335 = vmatpush1.msra.mxu0 0.0
    %336 = vmatprep.subr.mxu0 0.0
    %337 = vmatpush1.msra.mxu0 0.0
    %338 = vmatprep.subr.mxu0 0.0
    %339 = vmatpush1.msra.mxu0 0.0
    %340 = vmatprep.subr.mxu0 0.0
    %341 = vmatpush1.msra.mxu0 0.0
    %342 = vmatprep.subr.mxu0 0.0
    %343 = vmatpush1.msra.mxu0 0.0
    %344 = vmatprep.subr.mxu0 0.0
    %345 = vmatpush1.msra.mxu0 0.0
    %346 = vmatprep.subr.mxu0 0.0
    %347 = vmatpush1.msra.mxu0 0.0
    %348 = vmatprep.subr.mxu0 0.0
    %349 = vmatpush1.msra.mxu0 0.0
    %350 = vmatprep.subr.mxu0 0.0
    %351 = vmatpush1.msra.mxu0 0.0
    %352 = vmatprep.subr.mxu0 0.0
    %353 = vmatpush1.msra.mxu0 0.0
    %354 = vmatprep.subr.mxu0 0.0
    %355 = vmatpush1.msra.mxu0 0.0
    %356 = vmatprep.subr.mxu0 0.0
    %357 = vmatpush1.msra.mxu0 0.0
    %358 = vmatprep.mubr.f32.mxu0 0.0
    %359 = vmatmul.mubr.f32.gmra.mrb[0].mxu0 %v268
    %v360 = vpop.f32.mrb[0].mxu0
    %v361 = vadd.f32 %v292, %v360
    %v362 = vpop.f32.mrb[0].mxu0
    %363 = vdwg.mxu0
    %v364 = vmax.f32 %v361, 0.0
    %s365 = scalar_lea.vmem [#allocation7], 256
    %v366 = vld [vmem:[%s365] sm:$0xff]
    %v367 = vld [vmem:[%s365 + $0x8] sm:$0xff]
    %v368 = vld [vmem:[%s365 + $0x10] sm:$0xff]
    %v369 = vld [vmem:[%s365 + $0x18] sm:$0xff]
    %v370 = vld [vmem:[%s365 + $0x20] sm:$0xff]
    %v371 = vld [vmem:[%s365 + $0x28] sm:$0xff]
    %v372 = vld [vmem:[%s365 + $0x30] sm:$0xff]
    %v373 = vld [vmem:[%s365 + $0x38] sm:$0xff]
    %v374 = vld [vmem:[%s365 + $0x40] sm:$0xff]
    %v375 = vld [vmem:[%s365 + $0x48] sm:$0xff]
    %v376 = vld [vmem:[%s365 + $0x50] sm:$0xff]
    %v377 = vld [vmem:[%s365 + $0x58] sm:$0xff]
    %v378 = vld [vmem:[%s365 + $0x60] sm:$0xff]
    %v379 = vld [vmem:[%s365 + $0x68] sm:$0xff]
    %v380 = vld [vmem:[%s365 + $0x70] sm:$0xff]
    %v381 = vld [vmem:[%s365 + $0x78] sm:$0xff]
    %s382 = scalar_lea.vmem %s4, 2
    %v383 = vld [vmem:[%s382] sm:$0x1]
    %v385 = vlaneseq
    %v386 = vshrl.u32 %v385, 7
    %v387 = vsub.s32 0, %v386
    %v388 = vrot.slane %v383, %v387
    %390 = vmatprep.subr.mxu0 0.0
    %391 = vmatpush1.msra.mxu0 %v366
    %392 = vmatprep.subr.mxu0 0.0
    %393 = vmatpush1.msra.mxu0 %v367
    %394 = vmatprep.subr.mxu0 0.0
    %395 = vmatpush1.msra.mxu0 %v368
    %396 = vmatprep.subr.mxu0 0.0
    %397 = vmatpush1.msra.mxu0 %v369
    %398 = vmatprep.subr.mxu0 0.0
    %399 = vmatpush1.msra.mxu0 %v370
    %400 = vmatprep.subr.mxu0 0.0
    %401 = vmatpush1.msra.mxu0 %v371
    %402 = vmatprep.subr.mxu0 0.0
    %403 = vmatpush1.msra.mxu0 %v372
    %404 = vmatprep.subr.mxu0 0.0
    %405 = vmatpush1.msra.mxu0 %v373
    %406 = vmatprep.subr.mxu0 0.0
    %407 = vmatpush1.msra.mxu0 %v374
    %408 = vmatprep.subr.mxu0 0.0
    %409 = vmatpush1.msra.mxu0 %v375
    %410 = vmatprep.subr.mxu0 0.0
    %411 = vmatpush1.msra.mxu0 %v376
    %412 = vmatprep.subr.mxu0 0.0
    %413 = vmatpush1.msra.mxu0 %v377
    %414 = vmatprep.subr.mxu0 0.0
    %415 = vmatpush1.msra.mxu0 %v378
    %416 = vmatprep.subr.mxu0 0.0
    %417 = vmatpush1.msra.mxu0 %v379
    %418 = vmatprep.subr.mxu0 0.0
    %419 = vmatpush1.msra.mxu0 %v380
    %420 = vmatprep.subr.mxu0 0.0
    %421 = vmatpush1.msra.mxu0 %v381
    %422 = vmatprep.subr.mxu0 0.0
    %423 = vmatpush1.msra.mxu0 0.0
    %424 = vmatprep.subr.mxu0 0.0
    %425 = vmatpush1.msra.mxu0 0.0
    %426 = vmatprep.subr.mxu0 0.0
    %427 = vmatpush1.msra.mxu0 0.0
    %428 = vmatprep.subr.mxu0 0.0
    %429 = vmatpush1.msra.mxu0 0.0
    %430 = vmatprep.subr.mxu0 0.0
    %431 = vmatpush1.msra.mxu0 0.0
    %432 = vmatprep.subr.mxu0 0.0
    %433 = vmatpush1.msra.mxu0 0.0
    %434 = vmatprep.subr.mxu0 0.0
    %435 = vmatpush1.msra.mxu0 0.0
    %436 = vmatprep.subr.mxu0 0.0
    %437 = vmatpush1.msra.mxu0 0.0
    %438 = vmatprep.subr.mxu0 0.0
    %439 = vmatpush1.msra.mxu0 0.0
    %440 = vmatprep.subr.mxu0 0.0
    %441 = vmatpush1.msra.mxu0 0.0
    %442 = vmatprep.subr.mxu0 0.0
    %443 = vmatpush1.msra.mxu0 0.0
    %444 = vmatprep.subr.mxu0 0.0
    %445 = vmatpush1.msra.mxu0 0.0
    %446 = vmatprep.subr.mxu0 0.0
    %447 = vmatpush1.msra.mxu0 0.0
    %448 = vmatprep.subr.mxu0 0.0
    %449 = vmatpush1.msra.mxu0 0.0
    %450 = vmatprep.subr.mxu0 0.0
    %451 = vmatpush1.msra.mxu0 0.0
    %452 = vmatprep.subr.mxu0 0.0
    %453 = vmatpush1.msra.mxu0 0.0
    %454 = vmatprep.mubr.f32.mxu0 0.0
    %455 = vmatmul.mubr.f32.gmra.mrb[0].mxu0 %v364
    %v456 = vpop.f32.mrb[0].mxu0
    %v457 = vadd.f32 %v388, %v456
    %v458 = vpop.f32.mrb[0].mxu0
    %459 = vdwg.mxu0
    %v460 = vmax.f32 %v457, 0.0
    %s461 = scalar_lea.vmem [#allocation7], 384
    %v462 = vld [vmem:[%s461] sm:$0xff]
    %v463 = vld [vmem:[%s461 + $0x8] sm:$0xff]
    %v464 = vld [vmem:[%s461 + $0x10] sm:$0xff]
    %v465 = vld [vmem:[%s461 + $0x18] sm:$0xff]
    %v466 = vld [vmem:[%s461 + $0x20] sm:$0xff]
    %v467 = vld [vmem:[%s461 + $0x28] sm:$0xff]
    %v468 = vld [vmem:[%s461 + $0x30] sm:$0xff]
    %v469 = vld [vmem:[%s461 + $0x38] sm:$0xff]
    %v470 = vld [vmem:[%s461 + $0x40] sm:$0xff]
    %v471 = vld [vmem:[%s461 + $0x48] sm:$0xff]
    %v472 = vld [vmem:[%s461 + $0x50] sm:$0xff]
    %v473 = vld [vmem:[%s461 + $0x58] sm:$0xff]
    %v474 = vld [vmem:[%s461 + $0x60] sm:$0xff]
    %v475 = vld [vmem:[%s461 + $0x68] sm:$0xff]
    %v476 = vld [vmem:[%s461 + $0x70] sm:$0xff]
    %v477 = vld [vmem:[%s461 + $0x78] sm:$0xff]
    %s478 = scalar_lea.vmem %s4, 3
    %v479 = vld [vmem:[%s478] sm:$0x1]
    %v481 = vlaneseq
    %v482 = vshrl.u32 %v481, 7
    %v483 = vsub.s32 0, %v482
    %v484 = vrot.slane %v479, %v483
    %486 = vmatprep.subr.mxu0 0.0
    %487 = vmatpush1.msra.mxu0 %v462
    %488 = vmatprep.subr.mxu0 0.0
    %489 = vmatpush1.msra.mxu0 %v463
    %490 = vmatprep.subr.mxu0 0.0
    %491 = vmatpush1.msra.mxu0 %v464
    %492 = vmatprep.subr.mxu0 0.0
    %493 = vmatpush1.msra.mxu0 %v465
    %494 = vmatprep.subr.mxu0 0.0
    %495 = vmatpush1.msra.mxu0 %v466
    %496 = vmatprep.subr.mxu0 0.0
    %497 = vmatpush1.msra.mxu0 %v467
    %498 = vmatprep.subr.mxu0 0.0
    %499 = vmatpush1.msra.mxu0 %v468
    %500 = vmatprep.subr.mxu0 0.0
    %501 = vmatpush1.msra.mxu0 %v469
    %502 = vmatprep.subr.mxu0 0.0
    %503 = vmatpush1.msra.mxu0 %v470
    %504 = vmatprep.subr.mxu0 0.0
    %505 = vmatpush1.msra.mxu0 %v471
    %506 = vmatprep.subr.mxu0 0.0
    %507 = vmatpush1.msra.mxu0 %v472
    %508 = vmatprep.subr.mxu0 0.0
    %509 = vmatpush1.msra.mxu0 %v473
    %510 = vmatprep.subr.mxu0 0.0
    %511 = vmatpush1.msra.mxu0 %v474
    %512 = vmatprep.subr.mxu0 0.0
    %513 = vmatpush1.msra.mxu0 %v475
    %514 = vmatprep.subr.mxu0 0.0
    %515 = vmatpush1.msra.mxu0 %v476
    %516 = vmatprep.subr.mxu0 0.0
    %517 = vmatpush1.msra.mxu0 %v477
    %518 = vmatprep.subr.mxu0 0.0
    %519 = vmatpush1.msra.mxu0 0.0
    %520 = vmatprep.subr.mxu0 0.0
    %521 = vmatpush1.msra.mxu0 0.0
    %522 = vmatprep.subr.mxu0 0.0
    %523 = vmatpush1.msra.mxu0 0.0
    %524 = vmatprep.subr.mxu0 0.0
    %525 = vmatpush1.msra.mxu0 0.0
    %526 = vmatprep.subr.mxu0 0.0
    %527 = vmatpush1.msra.mxu0 0.0
    %528 = vmatprep.subr.mxu0 0.0
    %529 = vmatpush1.msra.mxu0 0.0
    %530 = vmatprep.subr.mxu0 0.0
    %531 = vmatpush1.msra.mxu0 0.0
    %532 = vmatprep.subr.mxu0 0.0
    %533 = vmatpush1.msra.mxu0 0.0
    %534 = vmatprep.subr.mxu0 0.0
    %535 = vmatpush1.msra.mxu0 0.0
    %536 = vmatprep.subr.mxu0 0.0
    %537 = vmatpush1.msra.mxu0 0.0
    %538 = vmatprep.subr.mxu0 0.0
    %539 = vmatpush1.msra.mxu0 0.0
    %540 = vmatprep.subr.mxu0 0.0
    %541 = vmatpush1.msra.mxu0 0.0
    %542 = vmatprep.subr.mxu0 0.0
    %543 = vmatpush1.msra.mxu0 0.0
    %544 = vmatprep.subr.mxu0 0.0
    %545 = vmatpush1.msra.mxu0 0.0
    %546 = vmatprep.subr.mxu0 0.0
    %547 = vmatpush1.msra.mxu0 0.0
    %548 = vmatprep.subr.mxu0 0.0
    %549 = vmatpush1.msra.mxu0 0.0
    %550 = vmatprep.mubr.f32.mxu0 0.0
    %551 = vmatmul.mubr.f32.gmra.mrb[0].mxu0 %v460
    %v552 = vpop.f32.mrb[0].mxu0
    %v553 = vadd.f32 %v484, %v552
    %v554 = vpop.f32.mrb[0].mxu0
    %555 = vdwg.mxu0
    %v556 = vmax.f32 %v553, 0.0
    %s557 = scalar_lea.vmem [#allocation7], 512
    %v558 = vld [vmem:[%s557] sm:$0xff]
    %v559 = vld [vmem:[%s557 + $0x8] sm:$0xff]
    %v560 = vld [vmem:[%s557 + $0x10] sm:$0xff]
    %v561 = vld [vmem:[%s557 + $0x18] sm:$0xff]
    %v562 = vld [vmem:[%s557 + $0x20] sm:$0xff]
    %v563 = vld [vmem:[%s557 + $0x28] sm:$0xff]
    %v564 = vld [vmem:[%s557 + $0x30] sm:$0xff]
    %v565 = vld [vmem:[%s557 + $0x38] sm:$0xff]
    %v566 = vld [vmem:[%s557 + $0x40] sm:$0xff]
    %v567 = vld [vmem:[%s557 + $0x48] sm:$0xff]
    %v568 = vld [vmem:[%s557 + $0x50] sm:$0xff]
    %v569 = vld [vmem:[%s557 + $0x58] sm:$0xff]
    %v570 = vld [vmem:[%s557 + $0x60] sm:$0xff]
    %v571 = vld [vmem:[%s557 + $0x68] sm:$0xff]
    %v572 = vld [vmem:[%s557 + $0x70] sm:$0xff]
    %v573 = vld [vmem:[%s557 + $0x78] sm:$0xff]
    %s574 = scalar_lea.vmem %s4, 4
    %v575 = vld [vmem:[%s574] sm:$0x1]
    %v577 = vlaneseq
    %v578 = vshrl.u32 %v577, 7
    %v579 = vsub.s32 0, %v578
    %v580 = vrot.slane %v575, %v579
    %582 = vmatprep.subr.mxu0 0.0
    %583 = vmatpush1.msra.mxu0 %v558
    %584 = vmatprep.subr.mxu0 0.0
    %585 = vmatpush1.msra.mxu0 %v559
    %586 = vmatprep.subr.mxu0 0.0
    %587 = vmatpush1.msra.mxu0 %v560
    %588 = vmatprep.subr.mxu0 0.0
    %589 = vmatpush1.msra.mxu0 %v561
    %590 = vmatprep.subr.mxu0 0.0
    %591 = vmatpush1.msra.mxu0 %v562
    %592 = vmatprep.subr.mxu0 0.0
    %593 = vmatpush1.msra.mxu0 %v563
    %594 = vmatprep.subr.mxu0 0.0
    %595 = vmatpush1.msra.mxu0 %v564
    %596 = vmatprep.subr.mxu0 0.0
    %597 = vmatpush1.msra.mxu0 %v565
    %598 = vmatprep.subr.mxu0 0.0
    %599 = vmatpush1.msra.mxu0 %v566
    %600 = vmatprep.subr.mxu0 0.0
    %601 = vmatpush1.msra.mxu0 %v567
    %602 = vmatprep.subr.mxu0 0.0
    %603 = vmatpush1.msra.mxu0 %v568
    %604 = vmatprep.subr.mxu0 0.0
    %605 = vmatpush1.msra.mxu0 %v569
    %606 = vmatprep.subr.mxu0 0.0
    %607 = vmatpush1.msra.mxu0 %v570
    %608 = vmatprep.subr.mxu0 0.0
    %609 = vmatpush1.msra.mxu0 %v571
    %610 = vmatprep.subr.mxu0 0.0
    %611 = vmatpush1.msra.mxu0 %v572
    %612 = vmatprep.subr.mxu0 0.0
    %613 = vmatpush1.msra.mxu0 %v573
    %614 = vmatprep.subr.mxu0 0.0
    %615 = vmatpush1.msra.mxu0 0.0
    %616 = vmatprep.subr.mxu0 0.0
    %617 = vmatpush1.msra.mxu0 0.0
    %618 = vmatprep.subr.mxu0 0.0
    %619 = vmatpush1.msra.mxu0 0.0
    %620 = vmatprep.subr.mxu0 0.0
    %621 = vmatpush1.msra.mxu0 0.0
    %622 = vmatprep.subr.mxu0 0.0
    %623 = vmatpush1.msra.mxu0 0.0
    %624 = vmatprep.subr.mxu0 0.0
    %625 = vmatpush1.msra.mxu0 0.0
    %626 = vmatprep.subr.mxu0 0.0
    %627 = vmatpush1.msra.mxu0 0.0
    %628 = vmatprep.subr.mxu0 0.0
    %629 = vmatpush1.msra.mxu0 0.0
    %630 = vmatprep.subr.mxu0 0.0
    %631 = vmatpush1.msra.mxu0 0.0
    %632 = vmatprep.subr.mxu0 0.0
    %633 = vmatpush1.msra.mxu0 0.0
    %634 = vmatprep.subr.mxu0 0.0
    %635 = vmatpush1.msra.mxu0 0.0
    %636 = vmatprep.subr.mxu0 0.0
    %637 = vmatpush1.msra.mxu0 0.0
    %638 = vmatprep.subr.mxu0 0.0
    %639 = vmatpush1.msra.mxu0 0.0
    %640 = vmatprep.subr.mxu0 0.0
    %641 = vmatpush1.msra.mxu0 0.0
    %642 = vmatprep.subr.mxu0 0.0
    %643 = vmatpush1.msra.mxu0 0.0
    %644 = vmatprep.subr.mxu0 0.0
    %645 = vmatpush1.msra.mxu0 0.0
    %646 = vmatprep.mubr.f32.mxu0 0.0
    %647 = vmatmul.mubr.f32.gmra.mrb[0].mxu0 %v556
    %v648 = vpop.f32.mrb[0].mxu0
    %v649 = vadd.f32 %v580, %v648
    %v650 = vpop.f32.mrb[0].mxu0
    %651 = vdwg.mxu0
    %v652 = vmax.f32 %v649, 0.0
    %v653 = vld [vmem:[#allocation8] sm:$0xff]
    %v654 = vld [vmem:[#allocation8 + $0x8] sm:$0xff]
    %v655 = vld [vmem:[#allocation8 + $0x10] sm:$0xff]
    %v656 = vld [vmem:[#allocation8 + $0x18] sm:$0xff]
    %v657 = vld [vmem:[#allocation8 + $0x20] sm:$0xff]
    %v658 = vld [vmem:[#allocation8 + $0x28] sm:$0xff]
    %v659 = vld [vmem:[#allocation8 + $0x30] sm:$0xff]
    %v660 = vld [vmem:[#allocation8 + $0x38] sm:$0xff]
    %v661 = vld [vmem:[#allocation8 + $0x40] sm:$0xff]
    %v662 = vld [vmem:[#allocation8 + $0x48] sm:$0xff]
    %v663 = vld [vmem:[#allocation8 + $0x50] sm:$0xff]
    %v664 = vld [vmem:[#allocation8 + $0x58] sm:$0xff]
    %v665 = vld [vmem:[#allocation8 + $0x60] sm:$0xff]
    %v666 = vld [vmem:[#allocation8 + $0x68] sm:$0xff]
    %v667 = vld [vmem:[#allocation8 + $0x70] sm:$0xff]
    %v668 = vld [vmem:[#allocation8 + $0x78] sm:$0xff]
    %v669 = vld [vmem:[%s6] sm:$0x1]
    %v671 = vlaneseq
    %v672 = vshrl.u32 %v671, 7
    %v673 = vsub.s32 0, %v672
    %v674 = vrot.slane %v669, %v673
    %676 = vmatprep.subr.mxu0 0.0
    %677 = vmatpush1.msra.mxu0 %v653
    %678 = vmatprep.subr.mxu0 0.0
    %679 = vmatpush1.msra.mxu0 %v654
    %680 = vmatprep.subr.mxu0 0.0
    %681 = vmatpush1.msra.mxu0 %v655
    %682 = vmatprep.subr.mxu0 0.0
    %683 = vmatpush1.msra.mxu0 %v656
    %684 = vmatprep.subr.mxu0 0.0
    %685 = vmatpush1.msra.mxu0 %v657
    %686 = vmatprep.subr.mxu0 0.0
    %687 = vmatpush1.msra.mxu0 %v658
    %688 = vmatprep.subr.mxu0 0.0
    %689 = vmatpush1.msra.mxu0 %v659
    %690 = vmatprep.subr.mxu0 0.0
    %691 = vmatpush1.msra.mxu0 %v660
    %692 = vmatprep.subr.mxu0 0.0
    %693 = vmatpush1.msra.mxu0 %v661
    %694 = vmatprep.subr.mxu0 0.0
    %695 = vmatpush1.msra.mxu0 %v662
    %696 = vmatprep.subr.mxu0 0.0
    %697 = vmatpush1.msra.mxu0 %v663
    %698 = vmatprep.subr.mxu0 0.0
    %699 = vmatpush1.msra.mxu0 %v664
    %700 = vmatprep.subr.mxu0 0.0
    %701 = vmatpush1.msra.mxu0 %v665
    %702 = vmatprep.subr.mxu0 0.0
    %703 = vmatpush1.msra.mxu0 %v666
    %704 = vmatprep.subr.mxu0 0.0
    %705 = vmatpush1.msra.mxu0 %v667
    %706 = vmatprep.subr.mxu0 0.0
    %707 = vmatpush1.msra.mxu0 %v668
    %708 = vmatprep.subr.mxu0 0.0
    %709 = vmatpush1.msra.mxu0 0.0
    %710 = vmatprep.subr.mxu0 0.0
    %711 = vmatpush1.msra.mxu0 0.0
    %712 = vmatprep.subr.mxu0 0.0
    %713 = vmatpush1.msra.mxu0 0.0
    %714 = vmatprep.subr.mxu0 0.0
    %715 = vmatpush1.msra.mxu0 0.0
    %716 = vmatprep.subr.mxu0 0.0
    %717 = vmatpush1.msra.mxu0 0.0
    %718 = vmatprep.subr.mxu0 0.0
    %719 = vmatpush1.msra.mxu0 0.0
    %720 = vmatprep.subr.mxu0 0.0
    %721 = vmatpush1.msra.mxu0 0.0
    %722 = vmatprep.subr.mxu0 0.0
    %723 = vmatpush1.msra.mxu0 0.0
    %724 = vmatprep.subr.mxu0 0.0
    %725 = vmatpush1.msra.mxu0 0.0
    %726 = vmatprep.subr.mxu0 0.0
    %727 = vmatpush1.msra.mxu0 0.0
    %728 = vmatprep.subr.mxu0 0.0
    %729 = vmatpush1.msra.mxu0 0.0
    %730 = vmatprep.subr.mxu0 0.0
    %731 = vmatpush1.msra.mxu0 0.0
    %732 = vmatprep.subr.mxu0 0.0
    %733 = vmatpush1.msra.mxu0 0.0
    %734 = vmatprep.subr.mxu0 0.0
    %735 = vmatpush1.msra.mxu0 0.0
    %736 = vmatprep.subr.mxu0 0.0
    %737 = vmatpush1.msra.mxu0 0.0
    %738 = vmatprep.subr.mxu0 0.0
    %739 = vmatpush1.msra.mxu0 0.0
    %740 = vmatprep.mubr.f32.mxu0 0.0
    %741 = vmatmul.mubr.f32.gmra.mrb[0].mxu0 %v652
    %v742 = vpop.f32.mrb[0].mxu0
    %v743 = vadd.f32 %v674, %v742
    %v744 = vpop.f32.mrb[0].mxu0
    %745 = vdwg.mxu0
    %746 = vst [vmem:[#allocation10] sm:$0xff] %v743
    // Predicated region
    $region46: #{tpu_custom_call.1} parent=1 // pred_check
      _
    $region47: #{tpu_custom_call.1} parent=1 // pred_check_branch
      %748 = sbr.rel (0) target = $region49
    $region48: #{tpu_custom_call.1} parent=1 // pred_region
      %s750 = ssub.s32 128, 128
      %751 = vsyncadd [#allocation4], %s750
      %s753 = sshll.u32 [#allocation10], 4
      %s754 = int_to_ptr.vmem [resolvable:$true] %s753
      %756 = dma.vmem_to_hbm [thread:$0]  %s754, 128, %s7, [#allocation4]
    $region49: #{tpu_custom_call.1} parent=1 // pred_fallthru
      _
    // Predicated region
    $region50: #{tpu_custom_call.1} parent=1 // pred_check
      _
    $region51: #{tpu_custom_call.1} parent=1 // pred_check_branch
      %758 = sbr.rel (0) target = $region53
    $region52: #{tpu_custom_call.1} parent=1 // pred_region
      %759 = dma.done [#allocation4], 128
    $region53: #{tpu_custom_call.1} parent=1 // pred_fallthru
      _
    %760 = vsyncpa [#allocation3], 1
    %761 = vsyncpa [#allocation6], 1
    %762 = vsyncpa [#allocation9], 1
    %763 = vsyncpa [#allocation4], 1

</llo_original>
